<compile_context>
chip_gen: v7x
topology: tpu7x:2x2x1
jax: 0.10.0
libtpu: 0.0.40
codegen_flags: <defaults>
</compile_context>

<pallas_src>
import functools
import math

import jax
import jax.numpy as jnp
from jax.experimental import pallas as pl
from jax.experimental.pallas import tpu as pltpu


def _round_up(x, m):
    return ((x + m - 1) // m) * m


def _embedding_kernel(table_ref, ids_ref, o_ref, *, scale):
    """One grid step: gather `tile` rows from the resident embedding table.

    table_ref: (vocab_p, d_model)  -- same block every step, resident in VMEM
    ids_ref:   (1, tile) int32     -- lane-dense token ids for this row tile
    o_ref:     (tile, d_model)     -- scaled embeddings
    """
    ids_row = ids_ref[...]                       # (1, tile), lane-major
    tile = ids_row.shape[1]
    vocab_p = table_ref.shape[0]

    # Tiny lane->sublane relayout (4*tile bytes) so tokens sit on sublanes for
    # the one-hot build; dwarfed by the (tile, d_model) output writeback.
    ids_col = jnp.transpose(ids_row)             # (tile, 1)

    # Exact 0/1 one-hot -- the sqrt(d_model) scale is NOT baked in here.
    col = jax.lax.broadcasted_iota(jnp.int32, (tile, vocab_p), 1)
    onehot = (col == ids_col).astype(table_ref.dtype)

    # MXU gather: (tile, vocab_p) @ (vocab_p, d_model) -> f32 accumulator.
    emb = jnp.dot(
        onehot,
        table_ref[...],
        preferred_element_type=jnp.float32,
        precision=jax.lax.Precision.HIGHEST,     # fp32-grade contraction (exact gather)
    )

    # Epilogue scale on the f32 accumulator, then cast to the output dtype.
    o_ref[...] = (emb * scale).astype(o_ref.dtype)


def input_embedding(ids, table, *, tile_tokens=None):
    """ids: integer array of any shape. table: (vocab_size, d_model).

    Returns table[ids] * sqrt(d_model) with shape ids.shape + (d_model,).
    """
    vocab, d_model = table.shape
    scale = float(math.sqrt(d_model))

    orig_shape = ids.shape
    num_tokens = math.prod(orig_shape) if orig_shape else 1
    assert num_tokens > 0, "empty token stream"

    # Pad only the tiny table's vocab dim to a sublane multiple (one-time cost).
    vocab_p = _round_up(vocab, 8)
    if vocab_p != vocab:
        table = jnp.pad(table, ((0, vocab_p - vocab), (0, 0)))

    itemsize = jnp.dtype(table.dtype).itemsize

    if tile_tokens is None:
        # ~4 MiB output blocks: amortize per-grid-step overhead on v7x's fast HBM
        # while double-buffered blocks stay far under every generation's VMEM.
        target_bytes = 4 * 1024 * 1024
        tile_tokens = max(128, (target_bytes // (d_model * itemsize)) // 128 * 128)

    # Never allocate a block bigger than the (8-rounded) token count ...
    tile_tokens = min(tile_tokens, _round_up(num_tokens, 8))
    # ... and keep >= 2 grid steps when there is enough work so the "parallel"
    # row grid can actually use both of v7x's TensorCores.
    if num_tokens >= 256:
        tile_tokens = min(tile_tokens,
                          max(128, _round_up(pl.cdiv(num_tokens, 2), 128)))
    tile_tokens = max(8, _round_up(tile_tokens, 8))

    grid = pl.cdiv(num_tokens, tile_tokens)

    # Lane-dense ids layout: (grid, tile_tokens) rows.  Host-side pad (with a
    # valid id 0) is at most tile_tokens-1 int32s; the corresponding output rows
    # fall in the masked partial last output block and are never written back.
    padded = grid * tile_tokens
    ids_flat = ids.reshape(-1).astype(jnp.int32)
    if padded != num_tokens:
        ids_flat = jnp.pad(ids_flat, (0, padded - num_tokens))
    ids2d = ids_flat.reshape(grid, tile_tokens)

    kernel = functools.partial(_embedding_kernel, scale=scale)

    cost = pl.CostEstimate(
        flops=2 * num_tokens * vocab_p * d_model,
        transcendentals=0,
        bytes_accessed=(num_tokens * d_model * itemsize      # output writeback
                        + padded * 4                          # ids read
                        + vocab_p * d_model * itemsize),      # table read (once)
    )

    out2d = pl.pallas_call(
        kernel,
        out_shape=jax.ShapeDtypeStruct((num_tokens, d_model), table.dtype),
        grid=(grid,),
        in_specs=[
            # Embedding table: same block every grid step -> stays resident.
            pl.BlockSpec((vocab_p, d_model), lambda i: (0, 0)),
            # Token ids: one lane-dense row per grid step (contiguous DMA).
            pl.BlockSpec((1, tile_tokens), lambda i: (i, 0)),
        ],
        out_specs=pl.BlockSpec((tile_tokens, d_model), lambda i: (i, 0)),
        compiler_params=pltpu.CompilerParams(
            dimension_semantics=("parallel",),   # shards rows across v7x's 2 TCs
            vmem_limit_bytes=48 * 1024 * 1024,   # explicit: v5e default is 16 MiB
        ),
        cost_estimate=cost,
    )(table, ids2d)

    return out2d.reshape(*orig_shape, d_model)

# TODO(synk): the one-hot MXU gather only scales to tiny vocabularies (hangman's
# 27); a realistic 32K+ vocab needs a scalar-prefetch row-DMA gather instead.


if __name__ == "__main__":
    key = jax.random.PRNGKey(0)
    k_ids, k_tab = jax.random.split(key)

    batch, seq = 2, 8
    vocab_size, d_model = 27, 128   # hangman vocab (26 letters + "_"); lane-dense d_model

    ids = jax.random.randint(k_ids, (batch, seq), 0, vocab_size, dtype=jnp.int32)
    table = jax.random.normal(k_tab, (vocab_size, d_model), dtype=jnp.float32)

    out = input_embedding(ids, table)
    out = jax.block_until_ready(out)

    # Pure-JAX reference mirroring the PyTorch forward:
    #   self.embedding(x) * math.sqrt(self.d_model)
    ref = jnp.take(table, ids, axis=0) * math.sqrt(d_model)

    assert out.shape == (batch, seq, d_model)
    assert jnp.allclose(out, ref, atol=1e-4, rtol=1e-4)

    print("KERNEL_OK")
</pallas_src>

<mosaic_0001>
module attributes {stable_mosaic.version = 11 : i64} {
  func.func @_embedding_kernel(%arg0: i32, %arg1: memref<32x128xf32, #tpu.memory_space<vmem>>, %arg2: memref<1x16xi32, #tpu.memory_space<vmem>>, %arg3: memref<16x128xf32, #tpu.memory_space<vmem>>) attributes {dimension_semantics = [#tpu.dimension_semantics<parallel>], iteration_bounds = array<i64: 1>, scalar_prefetch = 0 : i64, scratch_operands = 0 : i64, tpu.core_type = #tpu.core_type<tc>, window_params = [{pipeline_mode = #tpu.pipeline_mode<synchronous>, transform_indices = @transform_0, window_bounds = array<i64: 32, 128>}, {transform_indices = @transform_1, window_bounds = array<i64: 1, 16>}, {transform_indices = @transform_2, window_bounds = array<i64: 16, 128>}]} {
    %c0 = arith.constant 0 : index
    %c0_0 = arith.constant 0 : index
    %0 = vector.load %arg2[%c0, %c0_0] : memref<1x16xi32, #tpu.memory_space<vmem>>, vector<1x16xi32>
    %1 = tpu.transpose %0, [1, 0] : vector<1x16xi32> -> vector<16x1xi32>
    %2 = tpu.iota {dimensions = array<i32: 1>} : vector<16x32xi32>
    %3 = vector.broadcast %1 : vector<16x1xi32> to vector<16x32xi32>
    %4 = arith.cmpi eq, %2, %3 : vector<16x32xi32>
    %5 = arith.extui %4 : vector<16x32xi1> to vector<16x32xi32>
    %6 = arith.sitofp %5 : vector<16x32xi32> to vector<16x32xf32>
    %c0_1 = arith.constant 0 : index
    %c0_2 = arith.constant 0 : index
    %7 = vector.load %arg1[%c0_1, %c0_2] : memref<32x128xf32, #tpu.memory_space<vmem>>, vector<32x128xf32>
    %cst = arith.constant dense<0.000000e+00> : vector<16x128xf32>
    %8 = tpu.matmul %6, %7, %cst {dimension_numbers = #tpu.dot_dimension_numbers<[1], [0], [0], [1], [0, 0, 1, 1], [], []>, precision = #tpu.contract_precision<fp32>} : vector<16x32xf32>, vector<32x128xf32>, vector<16x128xf32> -> vector<16x128xf32>
    %cst_3 = arith.constant 11.3137083 : f32
    %9 = vector.broadcast %cst_3 : f32 to vector<16x128xf32>
    %10 = arith.mulf %8, %9 : vector<16x128xf32>
    %c0_4 = arith.constant 0 : index
    %c0_5 = arith.constant 0 : index
    %11 = vector.load %arg3[%c0_4, %c0_5] : memref<16x128xf32, #tpu.memory_space<vmem>>, vector<16x128xf32>
    tpu.vector_store %arg3[%c0_4, %c0_5], %10 {strides = array<i32>} : memref<16x128xf32, #tpu.memory_space<vmem>>, vector<16x128xf32>,
    return
  }
  func.func @transform_0(%arg0: i32) -> (i32, i32) {
    %c0_i32 = arith.constant 0 : i32
    %c0_i32_0 = arith.constant 0 : i32
    %c0_i32_1 = arith.constant 0 : i32
    return %c0_i32, %c0_i32_0 : i32, i32
  }
  func.func @transform_1(%arg0: i32) -> (i32, i32) {
    %c0_i32 = arith.constant 0 : i32
    %c0_i32_0 = arith.constant 0 : i32
    return %arg0, %c0_i32 : i32, i32
  }
  func.func @transform_2(%arg0: i32) -> (i32, i32) {
    %c0_i32 = arith.constant 0 : i32
    %c0_i32_0 = arith.constant 0 : i32
    return %arg0, %c0_i32 : i32, i32
  }
}

</mosaic_0001>

<llo_original>
// kernel: tpu_custom_call.1
$region0: #{tpu_custom_call.1}
  #allocation0 [shape = 'u32[]', space=smem, size = 0x4, offset = 0x4, fixed_abs, tag = 'smem constant byte address 0x4 - core index']
  #allocation1 [shape = 'u32[144,128]{1,0:T(1,128)}', space=vmem, size = 0x12000, scoped, tag = 'internal scratch']
  %s0 = inlined_call_operand.hbm [shape: f32[32,128], index: 0, kind: input, shape index: {}]
  %s1 = inlined_call_operand.vmem [shape: s32[1,16], index: 1, kind: input, shape index: {}]
  %s2 = inlined_call_operand.hbm [shape: f32[16,128], index: 2, kind: output, shape index: {}]
  %s3 = sld [smem:[#allocation0]]
  $region22: #{tpu_custom_call.1} parent=0
    _
  %s5 = ssub.s32 1, %s3
  %s6 = scalar_select 0, %s5, %s3
  $region1: #{tpu_custom_call.1} parent=0
    #allocation2 [shape = 'u8[16384]{0}', space=vmem, size = 0x4000, scoped, tag = 'input window, operand 0, single buffered']
    #allocation3 [shape = 's32[1]{0}', space=sflag, size = 0x4, scoped, tag = 'scoped memory for tpu_custom_call.1']
    #allocation4 [shape = 's32[1]{0}', space=sflag, size = 0x4, scoped, tag = 'scoped memory for tpu_custom_call.1']
    #allocation5 [shape = 'u8[8192]{0}', space=vmem, size = 0x2000, scoped, tag = 'output window, operand 0, single buffered']
    %7 = vsyncpa [#allocation3], 0
    %8 = vsyncpa [#allocation4], 0
    // Predicated region
    $region2: #{tpu_custom_call.1} parent=1 // pred_check
      _
    $region3: #{tpu_custom_call.1} parent=1 // pred_check_branch
      %10 = sbr.rel (0) target = $region5
    $region4: #{tpu_custom_call.1} parent=1 // pred_region
      %s12 = ssub.s32 512, 512
      %13 = vsyncadd [#allocation3], %s12
      %s14 = sshll.u32 [#allocation2], 4
      %s15 = int_to_ptr.vmem [resolvable:$true] %s14
      %20 = dma.hbm_to_vmem [thread:$0]  %s0, 512, %s15, [#allocation3], 128, 128, 8
    $region5: #{tpu_custom_call.1} parent=1 // pred_fallthru
      _
    // Predicated region
    $region6: #{tpu_custom_call.1} parent=1 // pred_check
      _
    $region7: #{tpu_custom_call.1} parent=1 // pred_check_branch
      %22 = sbr.rel (0) target = $region9
    $region8: #{tpu_custom_call.1} parent=1 // pred_region
      _
    $region9: #{tpu_custom_call.1} parent=1 // pred_fallthru
      _
    // Predicated region
    $region10: #{tpu_custom_call.1} parent=1 // pred_check
      _
    $region11: #{tpu_custom_call.1} parent=1 // pred_check_branch
      %24 = sbr.rel (0) target = $region13
    $region12: #{tpu_custom_call.1} parent=1 // pred_region
      %25 = dma.done [#allocation3], 512
    $region13: #{tpu_custom_call.1} parent=1 // pred_fallthru
      _
    %v26 = vld [vmem:[%s1] sm:$0x1]
    %27 = vxpose.xlu0.b32.start [1/16] %v26, 128
    %28 = vxpose.xlu0.b32.cont [2/16] 0, 128
    %29 = vxpose.xlu0.b32.cont [3/16] 0, 128
    %30 = vxpose.xlu0.b32.cont [4/16] 0, 128
    %31 = vxpose.xlu0.b32.cont [5/16] 0, 128
    %32 = vxpose.xlu0.b32.cont [6/16] 0, 128
    %33 = vxpose.xlu0.b32.cont [7/16] 0, 128
    %34 = vxpose.xlu0.b32.cont [8/16] 0, 128
    %35 = vxpose.xlu0.b32.cont [9/16] 0, 128
    %36 = vxpose.xlu0.b32.cont [10/16] 0, 128
    %37 = vxpose.xlu0.b32.cont [11/16] 0, 128
    %38 = vxpose.xlu0.b32.cont [12/16] 0, 128
    %39 = vxpose.xlu0.b32.cont [13/16] 0, 128
    %40 = vxpose.xlu0.b32.cont [14/16] 0, 128
    %41 = vxpose.xlu0.b32.cont [15/16] 0, 128
    %42 = vxpose.xlu0.b32.end [16/16] 0, 128
    %v43 = vpop.trf.xlu0
    %v44 = vpop.trf.xlu0
    %v45 = vpop.trf.xlu0
    %v46 = vpop.trf.xlu0
    %v47 = vpop.trf.xlu0
    %v48 = vpop.trf.xlu0
    %v49 = vpop.trf.xlu0
    %v50 = vpop.trf.xlu0
    %v51 = vpop.trf.xlu0
    %v52 = vpop.trf.xlu0
    %v53 = vpop.trf.xlu0
    %v54 = vpop.trf.xlu0
    %v55 = vpop.trf.xlu0
    %v56 = vpop.trf.xlu0
    %v57 = vpop.trf.xlu0
    %v58 = vpop.trf.xlu0
    %v59 = vlaneseq
    %v60 = vand.u32 %v59, 127
    %61 = vset.pattern.permute.xlu0 0
    %62 = vperm.xlu0 %61, %v43
    %v63 = vpop.permute.xlu0 %62
    %64 = vset.pattern.permute.xlu0 0
    %65 = vperm.xlu0 %64, %v44
    %v66 = vpop.permute.xlu0 %65
    %vm67 = vcmp.eq.s32.totalorder %v60, %v63
    %vm68 = vcmp.eq.s32.totalorder %v60, %v66
    %v69 = vsel %vm67, 1, 0
    %v70 = vsel %vm68, 1, 0
    %v71 = vcvt.s32.f32 %v69
    %v72 = vcvt.s32.f32 %v70
    %v73 = vld [vmem:[#allocation2] sm:$0xff]
    %v74 = vld [vmem:[#allocation2 + $0x8] sm:$0xff]
    %v75 = vld [vmem:[#allocation2 + $0x10] sm:$0xff]
    %v76 = vld [vmem:[#allocation2 + $0x18] sm:$0xff]
    %vm77 = vcmask 261120
    %v79 = vsel %vm77, %v71, 0
    %v82 = vsel %vm77, %v72, 0
    %84 = vmatprep.subr.mxu0 0.0
    %v85 = vand.u32 %v73, 4294901760
    %86 = vmatpush1.msra.mxu0 %v85
    %87 = vmatprep.subr.mxu0 0.0
    %v88 = vand.u32 %v74, 4294901760
    %89 = vmatpush1.msra.mxu0 %v88
    %90 = vmatprep.subr.mxu0 0.0
    %v91 = vand.u32 %v75, 4294901760
    %92 = vmatpush1.msra.mxu0 %v91
    %93 = vmatprep.subr.mxu0 0.0
    %v94 = vand.u32 %v76, 4294901760
    %95 = vmatpush1.msra.mxu0 %v94
    %96 = vmatprep.subr.mxu0 0.0
    %97 = vmatpush1.msra.mxu0 0.0
    %98 = vmatprep.subr.mxu0 0.0
    %99 = vmatpush1.msra.mxu0 0.0
    %100 = vmatprep.subr.mxu0 0.0
    %101 = vmatpush1.msra.mxu0 0.0
    %102 = vmatprep.subr.mxu0 0.0
    %103 = vmatpush1.msra.mxu0 0.0
    %104 = vmatprep.subr.mxu0 0.0
    %105 = vmatpush1.msra.mxu0 0.0
    %106 = vmatprep.subr.mxu0 0.0
    %107 = vmatpush1.msra.mxu0 0.0
    %108 = vmatprep.subr.mxu0 0.0
    %109 = vmatpush1.msra.mxu0 0.0
    %110 = vmatprep.subr.mxu0 0.0
    %111 = vmatpush1.msra.mxu0 0.0
    %112 = vmatprep.subr.mxu0 0.0
    %113 = vmatpush1.msra.mxu0 0.0
    %114 = vmatprep.subr.mxu0 0.0
    %115 = vmatpush1.msra.mxu0 0.0
    %116 = vmatprep.subr.mxu0 0.0
    %117 = vmatpush1.msra.mxu0 0.0
    %118 = vmatprep.subr.mxu0 0.0
    %119 = vmatpush1.msra.mxu0 0.0
    %120 = vmatprep.subr.mxu0 0.0
    %121 = vmatpush1.msra.mxu0 0.0
    %122 = vmatprep.subr.mxu0 0.0
    %123 = vmatpush1.msra.mxu0 0.0
    %124 = vmatprep.subr.mxu0 0.0
    %125 = vmatpush1.msra.mxu0 0.0
    %126 = vmatprep.subr.mxu0 0.0
    %127 = vmatpush1.msra.mxu0 0.0
    %128 = vmatprep.subr.mxu0 0.0
    %129 = vmatpush1.msra.mxu0 0.0
    %130 = vmatprep.subr.mxu0 0.0
    %131 = vmatpush1.msra.mxu0 0.0
    %132 = vmatprep.subr.mxu0 0.0
    %133 = vmatpush1.msra.mxu0 0.0
    %134 = vmatprep.subr.mxu0 0.0
    %135 = vmatpush1.msra.mxu0 0.0
    %136 = vmatprep.subr.mxu0 0.0
    %137 = vmatpush1.msra.mxu0 0.0
    %138 = vmatprep.subr.mxu0 0.0
    %139 = vmatpush1.msra.mxu0 0.0
    %140 = vmatprep.subr.mxu0 0.0
    %141 = vmatpush1.msra.mxu0 0.0
    %142 = vmatprep.subr.mxu0 0.0
    %143 = vmatpush1.msra.mxu0 0.0
    %144 = vmatprep.subr.mxu0 0.0
    %145 = vmatpush1.msra.mxu0 0.0
    %146 = vmatprep.subr.mxu0 0.0
    %147 = vmatpush1.msra.mxu0 0.0
    %148 = vmatprep.subr.mxu0 0.0
    %149 = vmatpush1.msra.mxu0 0.0
    %150 = vmatprep.subr.mxu0 0.0
    %151 = vmatpush1.msra.mxu0 0.0
    %152 = vmatprep.mubr.f32.mxu0 0.0
    %v153 = vand.u32 %v79, 4294901760
    %v154 = vsub.f32 %v79, %v153
    %v155 = vand.u32 %v154, 4294901760
    %v156 = vsub.f32 %v154, %v155
    %v157 = vand.u32 %v156, 4294901760
    %158 = vmatmul.mubr.f32.gmra.mrb[0].mxu0 %v157
    %v159 = vpop.f32.mrb[0].mxu0
    %v160 = vadd.f32 0.0, %v159
    %v161 = vpop.f32.mrb[0].mxu0
    %162 = vmatprep.mubr.f32.mxu0 0.0
    %v163 = vand.u32 %v82, 4294901760
    %v164 = vsub.f32 %v82, %v163
    %v165 = vand.u32 %v164, 4294901760
    %v166 = vsub.f32 %v164, %v165
    %v167 = vand.u32 %v166, 4294901760
    %168 = vmatmul.mubr.f32.gmra.mrb[0].mxu0 %v167
    %v169 = vpop.f32.mrb[0].mxu0
    %v170 = vadd.f32 0.0, %v169
    %v171 = vpop.f32.mrb[0].mxu0
    %172 = vdwg.mxu0
    %173 = vmatprep.subr.mxu0 0.0
    %v174 = vand.u32 %v73, 4294901760
    %v175 = vsub.f32 %v73, %v174
    %v176 = vand.u32 %v175, 4294901760
    %v177 = vsub.f32 %v175, %v176
    %v178 = vand.u32 %v177, 4294901760
    %179 = vmatpush1.msra.mxu0 %v178
    %180 = vmatprep.subr.mxu0 0.0
    %v181 = vand.u32 %v74, 4294901760
    %v182 = vsub.f32 %v74, %v181
    %v183 = vand.u32 %v182, 4294901760
    %v184 = vsub.f32 %v182, %v183
    %v185 = vand.u32 %v184, 4294901760
    %186 = vmatpush1.msra.mxu0 %v185
    %187 = vmatprep.subr.mxu0 0.0
    %v188 = vand.u32 %v75, 4294901760
    %v189 = vsub.f32 %v75, %v188
    %v190 = vand.u32 %v189, 4294901760
    %v191 = vsub.f32 %v189, %v190
    %v192 = vand.u32 %v191, 4294901760
    %193 = vmatpush1.msra.mxu0 %v192
    %194 = vmatprep.subr.mxu0 0.0
    %v195 = vand.u32 %v76, 4294901760
    %v196 = vsub.f32 %v76, %v195
    %v197 = vand.u32 %v196, 4294901760
    %v198 = vsub.f32 %v196, %v197
    %v199 = vand.u32 %v198, 4294901760
    %200 = vmatpush1.msra.mxu0 %v199
    %201 = vmatprep.subr.mxu0 0.0
    %202 = vmatpush1.msra.mxu0 0.0
    %203 = vmatprep.subr.mxu0 0.0
    %204 = vmatpush1.msra.mxu0 0.0
    %205 = vmatprep.subr.mxu0 0.0
    %206 = vmatpush1.msra.mxu0 0.0
    %207 = vmatprep.subr.mxu0 0.0
    %208 = vmatpush1.msra.mxu0 0.0
    %209 = vmatprep.subr.mxu0 0.0
    %210 = vmatpush1.msra.mxu0 0.0
    %211 = vmatprep.subr.mxu0 0.0
    %212 = vmatpush1.msra.mxu0 0.0
    %213 = vmatprep.subr.mxu0 0.0
    %214 = vmatpush1.msra.mxu0 0.0
    %215 = vmatprep.subr.mxu0 0.0
    %216 = vmatpush1.msra.mxu0 0.0
    %217 = vmatprep.subr.mxu0 0.0
    %218 = vmatpush1.msra.mxu0 0.0
    %219 = vmatprep.subr.mxu0 0.0
    %220 = vmatpush1.msra.mxu0 0.0
    %221 = vmatprep.subr.mxu0 0.0
    %222 = vmatpush1.msra.mxu0 0.0
    %223 = vmatprep.subr.mxu0 0.0
    %224 = vmatpush1.msra.mxu0 0.0
    %225 = vmatprep.subr.mxu0 0.0
    %226 = vmatpush1.msra.mxu0 0.0
    %227 = vmatprep.subr.mxu0 0.0
    %228 = vmatpush1.msra.mxu0 0.0
    %229 = vmatprep.subr.mxu0 0.0
    %230 = vmatpush1.msra.mxu0 0.0
    %231 = vmatprep.subr.mxu0 0.0
    %232 = vmatpush1.msra.mxu0 0.0
    %233 = vmatprep.subr.mxu0 0.0
    %234 = vmatpush1.msra.mxu0 0.0
    %235 = vmatprep.subr.mxu0 0.0
    %236 = vmatpush1.msra.mxu0 0.0
    %237 = vmatprep.subr.mxu0 0.0
    %238 = vmatpush1.msra.mxu0 0.0
    %239 = vmatprep.subr.mxu0 0.0
    %240 = vmatpush1.msra.mxu0 0.0
    %241 = vmatprep.subr.mxu0 0.0
    %242 = vmatpush1.msra.mxu0 0.0
    %243 = vmatprep.subr.mxu0 0.0
    %244 = vmatpush1.msra.mxu0 0.0
    %245 = vmatprep.subr.mxu0 0.0
    %246 = vmatpush1.msra.mxu0 0.0
    %247 = vmatprep.subr.mxu0 0.0
    %248 = vmatpush1.msra.mxu0 0.0
    %249 = vmatprep.subr.mxu0 0.0
    %250 = vmatpush1.msra.mxu0 0.0
    %251 = vmatprep.subr.mxu0 0.0
    %252 = vmatpush1.msra.mxu0 0.0
    %253 = vmatprep.subr.mxu0 0.0
    %254 = vmatpush1.msra.mxu0 0.0
    %255 = vmatprep.subr.mxu0 0.0
    %256 = vmatpush1.msra.mxu0 0.0
    %257 = vmatprep.mubr.f32.mxu0 0.0
    %v258 = vand.u32 %v79, 4294901760
    %259 = vmatmul.mubr.f32.gmra.mrb[0].mxu0 %v258
    %v260 = vpop.f32.mrb[0].mxu0
    %v261 = vadd.f32 %v160, %v260
    %v262 = vpop.f32.mrb[0].mxu0
    %263 = vmatprep.mubr.f32.mxu0 0.0
    %v264 = vand.u32 %v82, 4294901760
    %265 = vmatmul.mubr.f32.gmra.mrb[0].mxu0 %v264
    %v266 = vpop.f32.mrb[0].mxu0
    %v267 = vadd.f32 %v170, %v266
    %v268 = vpop.f32.mrb[0].mxu0
    %269 = vdwg.mxu0
    %270 = vmatprep.subr.mxu0 0.0
    %v271 = vand.u32 %v73, 4294901760
    %v272 = vsub.f32 %v73, %v271
    %273 = vmatpush1.msra.mxu0 %v272
    %274 = vmatprep.subr.mxu0 0.0
    %v275 = vand.u32 %v74, 4294901760
    %v276 = vsub.f32 %v74, %v275
    %277 = vmatpush1.msra.mxu0 %v276
    %278 = vmatprep.subr.mxu0 0.0
    %v279 = vand.u32 %v75, 4294901760
    %v280 = vsub.f32 %v75, %v279
    %281 = vmatpush1.msra.mxu0 %v280
    %282 = vmatprep.subr.mxu0 0.0
    %v283 = vand.u32 %v76, 4294901760
    %v284 = vsub.f32 %v76, %v283
    %285 = vmatpush1.msra.mxu0 %v284
    %286 = vmatprep.subr.mxu0 0.0
    %287 = vmatpush1.msra.mxu0 0.0
    %288 = vmatprep.subr.mxu0 0.0
    %289 = vmatpush1.msra.mxu0 0.0
    %290 = vmatprep.subr.mxu0 0.0
    %291 = vmatpush1.msra.mxu0 0.0
    %292 = vmatprep.subr.mxu0 0.0
    %293 = vmatpush1.msra.mxu0 0.0
    %294 = vmatprep.subr.mxu0 0.0
    %295 = vmatpush1.msra.mxu0 0.0
    %296 = vmatprep.subr.mxu0 0.0
    %297 = vmatpush1.msra.mxu0 0.0
    %298 = vmatprep.subr.mxu0 0.0
    %299 = vmatpush1.msra.mxu0 0.0
    %300 = vmatprep.subr.mxu0 0.0
    %301 = vmatpush1.msra.mxu0 0.0
    %302 = vmatprep.subr.mxu0 0.0
    %303 = vmatpush1.msra.mxu0 0.0
    %304 = vmatprep.subr.mxu0 0.0
    %305 = vmatpush1.msra.mxu0 0.0
    %306 = vmatprep.subr.mxu0 0.0
    %307 = vmatpush1.msra.mxu0 0.0
    %308 = vmatprep.subr.mxu0 0.0
    %309 = vmatpush1.msra.mxu0 0.0
    %310 = vmatprep.subr.mxu0 0.0
    %311 = vmatpush1.msra.mxu0 0.0
    %312 = vmatprep.subr.mxu0 0.0
    %313 = vmatpush1.msra.mxu0 0.0
    %314 = vmatprep.subr.mxu0 0.0
    %315 = vmatpush1.msra.mxu0 0.0
    %316 = vmatprep.subr.mxu0 0.0
    %317 = vmatpush1.msra.mxu0 0.0
    %318 = vmatprep.subr.mxu0 0.0
    %319 = vmatpush1.msra.mxu0 0.0
    %320 = vmatprep.subr.mxu0 0.0
    %321 = vmatpush1.msra.mxu0 0.0
    %322 = vmatprep.subr.mxu0 0.0
    %323 = vmatpush1.msra.mxu0 0.0
    %324 = vmatprep.subr.mxu0 0.0
    %325 = vmatpush1.msra.mxu0 0.0
    %326 = vmatprep.subr.mxu0 0.0
    %327 = vmatpush1.msra.mxu0 0.0
    %328 = vmatprep.subr.mxu0 0.0
    %329 = vmatpush1.msra.mxu0 0.0
    %330 = vmatprep.subr.mxu0 0.0
    %331 = vmatpush1.msra.mxu0 0.0
    %332 = vmatprep.subr.mxu0 0.0
    %333 = vmatpush1.msra.mxu0 0.0
    %334 = vmatprep.subr.mxu0 0.0
    %335 = vmatpush1.msra.mxu0 0.0
    %336 = vmatprep.subr.mxu0 0.0
    %337 = vmatpush1.msra.mxu0 0.0
    %338 = vmatprep.subr.mxu0 0.0
    %339 = vmatpush1.msra.mxu0 0.0
    %340 = vmatprep.subr.mxu0 0.0
    %341 = vmatpush1.msra.mxu0 0.0
    %342 = vmatprep.mubr.f32.mxu0 0.0
    %v343 = vand.u32 %v79, 4294901760
    %v344 = vsub.f32 %v79, %v343
    %345 = vmatmul.mubr.f32.gmra.mrb[0].mxu0 %v344
    %v346 = vpop.f32.mrb[0].mxu0
    %v347 = vadd.f32 %v261, %v346
    %v348 = vpop.f32.mrb[0].mxu0
    %349 = vmatprep.mubr.f32.mxu0 0.0
    %v350 = vand.u32 %v82, 4294901760
    %v351 = vsub.f32 %v82, %v350
    %352 = vmatmul.mubr.f32.gmra.mrb[0].mxu0 %v351
    %v353 = vpop.f32.mrb[0].mxu0
    %v354 = vadd.f32 %v267, %v353
    %v355 = vpop.f32.mrb[0].mxu0
    %356 = vdwg.mxu0
    %357 = vmatprep.subr.mxu0 0.0
    %v358 = vand.u32 %v73, 4294901760
    %359 = vmatpush1.msra.mxu0 %v358
    %360 = vmatprep.subr.mxu0 0.0
    %v361 = vand.u32 %v74, 4294901760
    %362 = vmatpush1.msra.mxu0 %v361
    %363 = vmatprep.subr.mxu0 0.0
    %v364 = vand.u32 %v75, 4294901760
    %365 = vmatpush1.msra.mxu0 %v364
    %366 = vmatprep.subr.mxu0 0.0
    %v367 = vand.u32 %v76, 4294901760
    %368 = vmatpush1.msra.mxu0 %v367
    %369 = vmatprep.subr.mxu0 0.0
    %370 = vmatpush1.msra.mxu0 0.0
    %371 = vmatprep.subr.mxu0 0.0
    %372 = vmatpush1.msra.mxu0 0.0
    %373 = vmatprep.subr.mxu0 0.0
    %374 = vmatpush1.msra.mxu0 0.0
    %375 = vmatprep.subr.mxu0 0.0
    %376 = vmatpush1.msra.mxu0 0.0
    %377 = vmatprep.subr.mxu0 0.0
    %378 = vmatpush1.msra.mxu0 0.0
    %379 = vmatprep.subr.mxu0 0.0
    %380 = vmatpush1.msra.mxu0 0.0
    %381 = vmatprep.subr.mxu0 0.0
    %382 = vmatpush1.msra.mxu0 0.0
    %383 = vmatprep.subr.mxu0 0.0
    %384 = vmatpush1.msra.mxu0 0.0
    %385 = vmatprep.subr.mxu0 0.0
    %386 = vmatpush1.msra.mxu0 0.0
    %387 = vmatprep.subr.mxu0 0.0
    %388 = vmatpush1.msra.mxu0 0.0
    %389 = vmatprep.subr.mxu0 0.0
    %390 = vmatpush1.msra.mxu0 0.0
    %391 = vmatprep.subr.mxu0 0.0
    %392 = vmatpush1.msra.mxu0 0.0
    %393 = vmatprep.subr.mxu0 0.0
    %394 = vmatpush1.msra.mxu0 0.0
    %395 = vmatprep.subr.mxu0 0.0
    %396 = vmatpush1.msra.mxu0 0.0
    %397 = vmatprep.subr.mxu0 0.0
    %398 = vmatpush1.msra.mxu0 0.0
    %399 = vmatprep.subr.mxu0 0.0
    %400 = vmatpush1.msra.mxu0 0.0
    %401 = vmatprep.subr.mxu0 0.0
    %402 = vmatpush1.msra.mxu0 0.0
    %403 = vmatprep.subr.mxu0 0.0
    %404 = vmatpush1.msra.mxu0 0.0
    %405 = vmatprep.subr.mxu0 0.0
    %406 = vmatpush1.msra.mxu0 0.0
    %407 = vmatprep.subr.mxu0 0.0
    %408 = vmatpush1.msra.mxu0 0.0
    %409 = vmatprep.subr.mxu0 0.0
    %410 = vmatpush1.msra.mxu0 0.0
    %411 = vmatprep.subr.mxu0 0.0
    %412 = vmatpush1.msra.mxu0 0.0
    %413 = vmatprep.subr.mxu0 0.0
    %414 = vmatpush1.msra.mxu0 0.0
    %415 = vmatprep.subr.mxu0 0.0
    %416 = vmatpush1.msra.mxu0 0.0
    %417 = vmatprep.subr.mxu0 0.0
    %418 = vmatpush1.msra.mxu0 0.0
    %419 = vmatprep.subr.mxu0 0.0
    %420 = vmatpush1.msra.mxu0 0.0
    %421 = vmatprep.subr.mxu0 0.0
    %422 = vmatpush1.msra.mxu0 0.0
    %423 = vmatprep.subr.mxu0 0.0
    %424 = vmatpush1.msra.mxu0 0.0
    %425 = vmatprep.mubr.f32.mxu0 0.0
    %v426 = vand.u32 %v79, 4294901760
    %v427 = vsub.f32 %v79, %v426
    %v428 = vand.u32 %v427, 4294901760
    %429 = vmatmul.mubr.f32.gmra.mrb[0].mxu0 %v428
    %v430 = vpop.f32.mrb[0].mxu0
    %v431 = vadd.f32 %v347, %v430
    %v432 = vpop.f32.mrb[0].mxu0
    %433 = vmatprep.mubr.f32.mxu0 0.0
    %v434 = vand.u32 %v82, 4294901760
    %v435 = vsub.f32 %v82, %v434
    %v436 = vand.u32 %v435, 4294901760
    %437 = vmatmul.mubr.f32.gmra.mrb[0].mxu0 %v436
    %v438 = vpop.f32.mrb[0].mxu0
    %v439 = vadd.f32 %v354, %v438
    %v440 = vpop.f32.mrb[0].mxu0
    %441 = vdwg.mxu0
    %442 = vmatprep.subr.mxu0 0.0
    %v443 = vand.u32 %v73, 4294901760
    %v444 = vsub.f32 %v73, %v443
    %v445 = vand.u32 %v444, 4294901760
    %446 = vmatpush1.msra.mxu0 %v445
    %447 = vmatprep.subr.mxu0 0.0
    %v448 = vand.u32 %v74, 4294901760
    %v449 = vsub.f32 %v74, %v448
    %v450 = vand.u32 %v449, 4294901760
    %451 = vmatpush1.msra.mxu0 %v450
    %452 = vmatprep.subr.mxu0 0.0
    %v453 = vand.u32 %v75, 4294901760
    %v454 = vsub.f32 %v75, %v453
    %v455 = vand.u32 %v454, 4294901760
    %456 = vmatpush1.msra.mxu0 %v455
    %457 = vmatprep.subr.mxu0 0.0
    %v458 = vand.u32 %v76, 4294901760
    %v459 = vsub.f32 %v76, %v458
    %v460 = vand.u32 %v459, 4294901760
    %461 = vmatpush1.msra.mxu0 %v460
    %462 = vmatprep.subr.mxu0 0.0
    %463 = vmatpush1.msra.mxu0 0.0
    %464 = vmatprep.subr.mxu0 0.0
    %465 = vmatpush1.msra.mxu0 0.0
    %466 = vmatprep.subr.mxu0 0.0
    %467 = vmatpush1.msra.mxu0 0.0
    %468 = vmatprep.subr.mxu0 0.0
    %469 = vmatpush1.msra.mxu0 0.0
    %470 = vmatprep.subr.mxu0 0.0
    %471 = vmatpush1.msra.mxu0 0.0
    %472 = vmatprep.subr.mxu0 0.0
    %473 = vmatpush1.msra.mxu0 0.0
    %474 = vmatprep.subr.mxu0 0.0
    %475 = vmatpush1.msra.mxu0 0.0
    %476 = vmatprep.subr.mxu0 0.0
    %477 = vmatpush1.msra.mxu0 0.0
    %478 = vmatprep.subr.mxu0 0.0
    %479 = vmatpush1.msra.mxu0 0.0
    %480 = vmatprep.subr.mxu0 0.0
    %481 = vmatpush1.msra.mxu0 0.0
    %482 = vmatprep.subr.mxu0 0.0
    %483 = vmatpush1.msra.mxu0 0.0
    %484 = vmatprep.subr.mxu0 0.0
    %485 = vmatpush1.msra.mxu0 0.0
    %486 = vmatprep.subr.mxu0 0.0
    %487 = vmatpush1.msra.mxu0 0.0
    %488 = vmatprep.subr.mxu0 0.0
    %489 = vmatpush1.msra.mxu0 0.0
    %490 = vmatprep.subr.mxu0 0.0
    %491 = vmatpush1.msra.mxu0 0.0
    %492 = vmatprep.subr.mxu0 0.0
    %493 = vmatpush1.msra.mxu0 0.0
    %494 = vmatprep.subr.mxu0 0.0
    %495 = vmatpush1.msra.mxu0 0.0
    %496 = vmatprep.subr.mxu0 0.0
    %497 = vmatpush1.msra.mxu0 0.0
    %498 = vmatprep.subr.mxu0 0.0
    %499 = vmatpush1.msra.mxu0 0.0
    %500 = vmatprep.subr.mxu0 0.0
    %501 = vmatpush1.msra.mxu0 0.0
    %502 = vmatprep.subr.mxu0 0.0
    %503 = vmatpush1.msra.mxu0 0.0
    %504 = vmatprep.subr.mxu0 0.0
    %505 = vmatpush1.msra.mxu0 0.0
    %506 = vmatprep.subr.mxu0 0.0
    %507 = vmatpush1.msra.mxu0 0.0
    %508 = vmatprep.subr.mxu0 0.0
    %509 = vmatpush1.msra.mxu0 0.0
    %510 = vmatprep.subr.mxu0 0.0
    %511 = vmatpush1.msra.mxu0 0.0
    %512 = vmatprep.subr.mxu0 0.0
    %513 = vmatpush1.msra.mxu0 0.0
    %514 = vmatprep.subr.mxu0 0.0
    %515 = vmatpush1.msra.mxu0 0.0
    %516 = vmatprep.subr.mxu0 0.0
    %517 = vmatpush1.msra.mxu0 0.0
    %518 = vmatprep.mubr.f32.mxu0 0.0
    %v519 = vand.u32 %v79, 4294901760
    %520 = vmatmul.mubr.f32.gmra.mrb[0].mxu0 %v519
    %v521 = vpop.f32.mrb[0].mxu0
    %v522 = vadd.f32 %v431, %v521
    %v523 = vpop.f32.mrb[0].mxu0
    %524 = vmatprep.mubr.f32.mxu0 0.0
    %v525 = vand.u32 %v82, 4294901760
    %526 = vmatmul.mubr.f32.gmra.mrb[0].mxu0 %v525
    %v527 = vpop.f32.mrb[0].mxu0
    %v528 = vadd.f32 %v439, %v527
    %v529 = vpop.f32.mrb[0].mxu0
    %530 = vdwg.mxu0
    %531 = vmatprep.subr.mxu0 0.0
    %v532 = vand.u32 %v73, 4294901760
    %533 = vmatpush1.msra.mxu0 %v532
    %534 = vmatprep.subr.mxu0 0.0
    %v535 = vand.u32 %v74, 4294901760
    %536 = vmatpush1.msra.mxu0 %v535
    %537 = vmatprep.subr.mxu0 0.0
    %v538 = vand.u32 %v75, 4294901760
    %539 = vmatpush1.msra.mxu0 %v538
    %540 = vmatprep.subr.mxu0 0.0
    %v541 = vand.u32 %v76, 4294901760
    %542 = vmatpush1.msra.mxu0 %v541
    %543 = vmatprep.subr.mxu0 0.0
    %544 = vmatpush1.msra.mxu0 0.0
    %545 = vmatprep.subr.mxu0 0.0
    %546 = vmatpush1.msra.mxu0 0.0
    %547 = vmatprep.subr.mxu0 0.0
    %548 = vmatpush1.msra.mxu0 0.0
    %549 = vmatprep.subr.mxu0 0.0
    %550 = vmatpush1.msra.mxu0 0.0
    %551 = vmatprep.subr.mxu0 0.0
    %552 = vmatpush1.msra.mxu0 0.0
    %553 = vmatprep.subr.mxu0 0.0
    %554 = vmatpush1.msra.mxu0 0.0
    %555 = vmatprep.subr.mxu0 0.0
    %556 = vmatpush1.msra.mxu0 0.0
    %557 = vmatprep.subr.mxu0 0.0
    %558 = vmatpush1.msra.mxu0 0.0
    %559 = vmatprep.subr.mxu0 0.0
    %560 = vmatpush1.msra.mxu0 0.0
    %561 = vmatprep.subr.mxu0 0.0
    %562 = vmatpush1.msra.mxu0 0.0
    %563 = vmatprep.subr.mxu0 0.0
    %564 = vmatpush1.msra.mxu0 0.0
    %565 = vmatprep.subr.mxu0 0.0
    %566 = vmatpush1.msra.mxu0 0.0
    %567 = vmatprep.subr.mxu0 0.0
    %568 = vmatpush1.msra.mxu0 0.0
    %569 = vmatprep.subr.mxu0 0.0
    %570 = vmatpush1.msra.mxu0 0.0
    %571 = vmatprep.subr.mxu0 0.0
    %572 = vmatpush1.msra.mxu0 0.0
    %573 = vmatprep.subr.mxu0 0.0
    %574 = vmatpush1.msra.mxu0 0.0
    %575 = vmatprep.subr.mxu0 0.0
    %576 = vmatpush1.msra.mxu0 0.0
    %577 = vmatprep.subr.mxu0 0.0
    %578 = vmatpush1.msra.mxu0 0.0
    %579 = vmatprep.subr.mxu0 0.0
    %580 = vmatpush1.msra.mxu0 0.0
    %581 = vmatprep.subr.mxu0 0.0
    %582 = vmatpush1.msra.mxu0 0.0
    %583 = vmatprep.subr.mxu0 0.0
    %584 = vmatpush1.msra.mxu0 0.0
    %585 = vmatprep.subr.mxu0 0.0
    %586 = vmatpush1.msra.mxu0 0.0
    %587 = vmatprep.subr.mxu0 0.0
    %588 = vmatpush1.msra.mxu0 0.0
    %589 = vmatprep.subr.mxu0 0.0
    %590 = vmatpush1.msra.mxu0 0.0
    %591 = vmatprep.subr.mxu0 0.0
    %592 = vmatpush1.msra.mxu0 0.0
    %593 = vmatprep.subr.mxu0 0.0
    %594 = vmatpush1.msra.mxu0 0.0
    %595 = vmatprep.subr.mxu0 0.0
    %596 = vmatpush1.msra.mxu0 0.0
    %597 = vmatprep.subr.mxu0 0.0
    %598 = vmatpush1.msra.mxu0 0.0
    %599 = vmatprep.mubr.f32.mxu0 0.0
    %v600 = vand.u32 %v79, 4294901760
    %601 = vmatmul.mubr.f32.gmra.mrb[0].mxu0 %v600
    %v602 = vpop.f32.mrb[0].mxu0
    %v603 = vadd.f32 %v522, %v602
    %v604 = vpop.f32.mrb[0].mxu0
    %605 = vmatprep.mubr.f32.mxu0 0.0
    %v606 = vand.u32 %v82, 4294901760
    %607 = vmatmul.mubr.f32.gmra.mrb[0].mxu0 %v606
    %v608 = vpop.f32.mrb[0].mxu0
    %v609 = vadd.f32 %v528, %v608
    %v610 = vpop.f32.mrb[0].mxu0
    %611 = vdwg.mxu0
    %v612 = vmul.f32 %v603, 11.313708
    %v613 = vmul.f32 %v609, 11.313708
    %614 = vst [vmem:[#allocation5] sm:$0xff] %v612
    %615 = vst [vmem:[#allocation5 + $0x8] sm:$0xff] %v613
    // Predicated region
    $region14: #{tpu_custom_call.1} parent=1 // pred_check
      _
    $region15: #{tpu_custom_call.1} parent=1 // pred_check_branch
      %617 = sbr.rel (0) target = $region17
    $region16: #{tpu_custom_call.1} parent=1 // pred_region
      %s619 = ssub.s32 256, 256
      %620 = vsyncadd [#allocation4], %s619
      %s621 = sshll.u32 [#allocation5], 4
      %s622 = int_to_ptr.vmem [resolvable:$true] %s621
      %627 = dma.vmem_to_hbm [thread:$0]  %s622, 256, %s2, [#allocation4], 128, 128, 8
    $region17: #{tpu_custom_call.1} parent=1 // pred_fallthru
      _
    // Predicated region
    $region18: #{tpu_custom_call.1} parent=1 // pred_check
      _
    $region19: #{tpu_custom_call.1} parent=1 // pred_check_branch
      %629 = sbr.rel (0) target = $region21
    $region20: #{tpu_custom_call.1} parent=1 // pred_region
      %630 = dma.done [#allocation4], 256
    $region21: #{tpu_custom_call.1} parent=1 // pred_fallthru
      _
    %631 = vsyncpa [#allocation3], 1
    %632 = vsyncpa [#allocation4], 1

</llo_original>
